<compile_context>
chip_gen: v5e
topology: v5e:2x2
jax: 0.10.0
libtpu: 0.0.40
codegen_flags: <defaults>
</compile_context>

<pallas_src>
import functools

import jax
import jax.numpy as jnp
from jax.experimental import pallas as pl
from jax.experimental.pallas import tpu as pltpu


def _round_up(x, m):
    return (x + m - 1) // m * m


def _elr_loss_kernel(out_ref,        # (TB, Cp) logits tile      (VMEM, pipelined)
                     tgt_ref,        # (TB, Cp) target tile      (VMEM, pipelined)
                     hist_ref,       # (TB, Cp) gathered history (VMEM, pipelined)
                     partial_ref,    # (1, 1)   per-tile partial sum (SMEM)
                     *, lambda_, batch, tile_b):
    base = pl.program_id(0) * tile_b

    # f32 compute regardless of input dtype (bf16 inputs are fine).
    logits = out_ref[...].astype(jnp.float32)
    target = tgt_ref[...].astype(jnp.float32)
    hist = hist_ref[...].astype(jnp.float32)

    # Numerically-stable softmax pieces.  Padded class lanes hold -1e9 logits
    # -> exp == 0, so they drop out of every lane reduction.
    m = jnp.max(logits, axis=1, keepdims=True)            # (TB, 1)
    shifted = logits - m
    exps = jnp.exp(shifted)
    denom = jnp.sum(exps, axis=1, keepdims=True)           # (TB, 1)

    # Mask off padded rows of a ragged final tile.
    rows = base + jax.lax.broadcasted_iota(jnp.int32, (tile_b, 1), 0)
    mask = (rows < batch).astype(jnp.float32)               # (TB, 1)

    # CE without materializing log_softmax:
    #   sum(-t * (shifted - log(denom))) = log(denom)*sum(t) - sum(t*shifted)
    log_denom = jnp.log(denom)
    t_sum = jnp.sum(target, axis=1, keepdims=True)
    ts_sum = jnp.sum(target * shifted, axis=1, keepdims=True)
    ce_part = jnp.sum((log_denom * t_sum - ts_sum) * mask)

    # Exact softmax (no approx reciprocal: log(1 - inner) amplifies its error
    # when predictions are confident), then the PyTorch clamp.
    y_pred = jnp.clip(exps / denom, 0.0001, 1.0 - 0.0001)

    # ELR regularizer.  Padded rows/lanes of `hist` are 0 -> inner == 0 there.
    inner = jnp.sum(hist * y_pred, axis=1, keepdims=True)
    reg_part = jnp.sum(jnp.log(1.0 - inner * mask) * mask)

    partial_ref[0, 0] = (ce_part + lambda_ * reg_part).astype(jnp.float32)


def elr_loss(index, output, target, history, *, lambda_=3.0, tile_b=512):
    """Pallas implementation of ELRLoss.forward.

    index:   (B,)   integer sample indices into `history`
    output:  (B, C) logits (f32 or bf16)
    target:  (B, C) soft labels
    history: (N, C) running probability history (module state)
    """
    batch, num_classes = output.shape

    # ---- gather in the wrapper: one contiguous (B, C) stream at full HBM
    #      bandwidth instead of per-row DMAs inside the kernel.
    hist_batch = jnp.take(history, index.astype(jnp.int32), axis=0)

    # ---- lane-dense class padding (multiple of 128 lanes).
    padded_c = _round_up(num_classes, 128)
    pad_c = padded_c - num_classes
    if pad_c:
        output = jnp.pad(output, ((0, 0), (0, pad_c)), constant_values=-1e9)
        target = jnp.pad(target, ((0, 0), (0, pad_c)))
        hist_batch = jnp.pad(hist_batch, ((0, 0), (0, pad_c)))

    itemsize = max(output.dtype.itemsize, target.dtype.itemsize,
                   hist_batch.dtype.itemsize)

    # ---- batch tile: big (512 default), multiple of 8 sublanes, capped so
    #      3 streams x 2 pipeline buffers stay inside a v7x-safe VMEM budget.
    vmem_budget = 48 * 2**20
    tb_cap = max(8, (vmem_budget // (6 * padded_c * itemsize)) // 8 * 8)
    tb = min(_round_up(tile_b, 8), _round_up(batch, 8), tb_cap)
    # Ensure >= 2 grid tiles when there is enough work so the "parallel" axis
    # can shard across v7x's two TensorCores (one extra tiny step elsewhere).
    if batch >= 16 and _round_up(batch, tb) // tb < 2:
        tb = max(8, _round_up(pl.cdiv(batch, 2), 8))
    padded_b = _round_up(batch, tb)
    num_tiles = padded_b // tb

    if padded_b != batch:
        pad_b = padded_b - batch
        output = jnp.pad(output, ((0, pad_b), (0, 0)))
        target = jnp.pad(target, ((0, pad_b), (0, 0)))
        hist_batch = jnp.pad(hist_batch, ((0, pad_b), (0, 0)))

    kernel = functools.partial(_elr_loss_kernel, lambda_=float(lambda_),
                               batch=batch, tile_b=tb)

    grid_spec = pltpu.PrefetchScalarGridSpec(
        num_scalar_prefetch=0,
        grid=(num_tiles,),
        in_specs=[
            pl.BlockSpec((tb, padded_c), lambda i: (i, 0)),   # logits
            pl.BlockSpec((tb, padded_c), lambda i: (i, 0)),   # targets
            pl.BlockSpec((tb, padded_c), lambda i: (i, 0)),   # gathered history
        ],
        out_specs=pl.BlockSpec((1, 1), lambda i: (i, 0),
                               memory_space=pltpu.MemorySpace.SMEM),
    )

    # VMEM limit derived from the chip's actual capacity (v7x has only 64 MiB).
    vmem_need = 3 * 2 * tb * padded_c * itemsize
    try:
        vmem_cap = pltpu.get_tpu_info().vmem_capacity_bytes
    except Exception:
        vmem_cap = 64 * 2**20
    vmem_limit = int(max(4 * 2**20, min(vmem_cap - 16 * 2**20, 2 * vmem_need)))

    cost = pl.CostEstimate(
        flops=int(10 * padded_b * padded_c),
        transcendentals=int(padded_b * padded_c + 2 * padded_b),
        bytes_accessed=int(3 * padded_b * padded_c * itemsize + num_tiles * 4),
    )

    partials = pl.pallas_call(
        kernel,
        out_shape=jax.ShapeDtypeStruct((num_tiles, 1), jnp.float32),
        grid_spec=grid_spec,
        compiler_params=pltpu.CompilerParams(
            dimension_semantics=("parallel",),   # per-tile partials independent
            vmem_limit_bytes=vmem_limit,
        ),
        cost_estimate=cost,
    )(output, target, hist_batch)

    return jnp.sum(partials) * (1.0 / batch)


def _elr_loss_ref(index, output, target, history, *, lambda_=3.0):
    """Pure-JAX reference mirroring the PyTorch forward."""
    y_pred = jax.nn.softmax(output, axis=1)
    y_pred = jnp.clip(y_pred, 0.0001, 1.0 - 0.0001)
    ce_loss = jnp.mean(jnp.sum(-target * jax.nn.log_softmax(output, axis=1), axis=1))
    reg = jnp.mean(jnp.log(1.0 - jnp.sum(history[index] * y_pred, axis=1)))
    return ce_loss + lambda_ * reg


if __name__ == "__main__":
    num_classes = 32
    num_samples = 16
    batch = 8
    lambda_ = 3.0

    key = jax.random.PRNGKey(0)
    k_out, k_lbl, k_hist, k_idx = jax.random.split(key, 4)

    output = jax.random.normal(k_out, (batch, num_classes), dtype=jnp.float32)
    labels = jax.random.randint(k_lbl, (batch,), 0, num_classes)
    target = jax.nn.one_hot(labels, num_classes, dtype=jnp.float32)
    index = jax.random.randint(k_idx, (batch,), 0, num_samples).astype(jnp.int32)

    # module state: history starts as zeros in __init__; seed it with a
    # deterministic softmax-like table so the ELR regularizer is non-trivial.
    history = jax.nn.softmax(
        jax.random.normal(k_hist, (num_samples, num_classes), dtype=jnp.float32),
        axis=1,
    )

    loss = elr_loss(index, output, target, history, lambda_=lambda_)
    loss = jax.block_until_ready(loss)

    ref = _elr_loss_ref(index, output, target, history, lambda_=lambda_)
    assert jnp.allclose(loss, ref, rtol=1e-4, atol=1e-4), (loss, ref)

    print("KERNEL_OK")
</pallas_src>

<mosaic_0001>
module attributes {stable_mosaic.version = 11 : i64} {
  func.func @_elr_loss_kernel(%arg0: i32, %arg1: memref<8x128xf32, #tpu.memory_space<vmem>>, %arg2: memref<8x128xf32, #tpu.memory_space<vmem>>, %arg3: memref<8x128xf32, #tpu.memory_space<vmem>>, %arg4: memref<1x1xf32, #tpu.memory_space<smem>>) attributes {dimension_semantics = [#tpu.dimension_semantics<parallel>], iteration_bounds = array<i64: 1>, scalar_prefetch = 0 : i64, scratch_operands = 0 : i64, tpu.core_type = #tpu.core_type<tc>, window_params = [{transform_indices = @transform_0, window_bounds = array<i64: 8, 128>}, {transform_indices = @transform_1, window_bounds = array<i64: 8, 128>}, {transform_indices = @transform_2, window_bounds = array<i64: 8, 128>}, {transform_indices = @transform_3, window_bounds = array<i64: 1, 1>}]} {
    %c8_i32 = arith.constant 8 : i32
    %0 = arith.muli %arg0, %c8_i32 : i32
    %c0 = arith.constant 0 : index
    %c0_0 = arith.constant 0 : index
    %1 = vector.load %arg1[%c0, %c0_0] : memref<8x128xf32, #tpu.memory_space<vmem>>, vector<8x128xf32>
    %c0_1 = arith.constant 0 : index
    %c0_2 = arith.constant 0 : index
    %2 = vector.load %arg2[%c0_1, %c0_2] : memref<8x128xf32, #tpu.memory_space<vmem>>, vector<8x128xf32>
    %c0_3 = arith.constant 0 : index
    %c0_4 = arith.constant 0 : index
    %3 = vector.load %arg3[%c0_3, %c0_4] : memref<8x128xf32, #tpu.memory_space<vmem>>, vector<8x128xf32>
    %cst = arith.constant dense<0xFF800000> : vector<8xf32>
    %4 = vector.multi_reduction <maximumf>, %1, %cst [1] : vector<8x128xf32> to vector<8xf32>
    %5 = vector.shape_cast %4 : vector<8xf32> to vector<8x1xf32>
    %6 = vector.broadcast %5 : vector<8x1xf32> to vector<8x128xf32>
    %7 = arith.subf %1, %6 : vector<8x128xf32>
    %8 = math.exp %7 : vector<8x128xf32>
    %cst_5 = arith.constant dense<0.000000e+00> : vector<8xf32>
    %9 = vector.multi_reduction <add>, %8, %cst_5 [1] : vector<8x128xf32> to vector<8xf32>
    %10 = vector.shape_cast %9 : vector<8xf32> to vector<8x1xf32>
    %11 = tpu.iota {dimensions = array<i32: 0>} : vector<8x1xi32>
    %12 = vector.broadcast %0 : i32 to vector<8x1xi32>
    %13 = arith.addi %12, %11 : vector<8x1xi32>
    %c8_i32_6 = arith.constant 8 : i32
    %14 = vector.broadcast %c8_i32_6 : i32 to vector<8x1xi32>
    %15 = arith.cmpi slt, %13, %14 : vector<8x1xi32>
    %16 = arith.extui %15 : vector<8x1xi1> to vector<8x1xi32>
    %17 = arith.sitofp %16 : vector<8x1xi32> to vector<8x1xf32>
    %18 = math.log %10 : vector<8x1xf32>
    %cst_7 = arith.constant dense<0.000000e+00> : vector<8xf32>
    %19 = vector.multi_reduction <add>, %2, %cst_7 [1] : vector<8x128xf32> to vector<8xf32>
    %20 = vector.shape_cast %19 : vector<8xf32> to vector<8x1xf32>
    %21 = arith.mulf %2, %7 : vector<8x128xf32>
    %cst_8 = arith.constant dense<0.000000e+00> : vector<8xf32>
    %22 = vector.multi_reduction <add>, %21, %cst_8 [1] : vector<8x128xf32> to vector<8xf32>
    %23 = vector.shape_cast %22 : vector<8xf32> to vector<8x1xf32>
    %24 = arith.mulf %18, %20 : vector<8x1xf32>
    %25 = arith.subf %24, %23 : vector<8x1xf32>
    %26 = arith.mulf %25, %17 : vector<8x1xf32>
    %27 = vector.shape_cast %26 : vector<8x1xf32> to vector<1x8x1xf32>
    %cst_9 = arith.constant dense<0.000000e+00> : vector<1xf32>
    %28 = vector.multi_reduction <add>, %27, %cst_9 [1, 2] : vector<1x8x1xf32> to vector<1xf32>
    %29 = vector.shape_cast %28 : vector<1xf32> to vector<1x1x1xf32>
    %30 = vector.extract %29[0, 0, 0] : f32 from vector<1x1x1xf32>
    %31 = vector.broadcast %10 : vector<8x1xf32> to vector<8x128xf32>
    %32 = arith.divf %8, %31 : vector<8x128xf32>
    %cst_10 = arith.constant 9.99999974E-5 : f32
    %cst_11 = arith.constant 0.999899983 : f32
    %33 = vector.broadcast %cst_10 : f32 to vector<8x128xf32>
    %34 = arith.maximumf %33, %32 : vector<8x128xf32>
    %35 = vector.broadcast %cst_11 : f32 to vector<8x128xf32>
    %36 = arith.minimumf %35, %34 : vector<8x128xf32>
    %37 = arith.mulf %3, %36 : vector<8x128xf32>
    %cst_12 = arith.constant dense<0.000000e+00> : vector<8xf32>
    %38 = vector.multi_reduction <add>, %37, %cst_12 [1] : vector<8x128xf32> to vector<8xf32>
    %39 = vector.shape_cast %38 : vector<8xf32> to vector<8x1xf32>
    %40 = arith.mulf %39, %17 : vector<8x1xf32>
    %cst_13 = arith.constant 1.000000e+00 : f32
    %41 = vector.broadcast %cst_13 : f32 to vector<8x1xf32>
    %42 = arith.subf %41, %40 : vector<8x1xf32>
    %43 = math.log %42 : vector<8x1xf32>
    %44 = arith.mulf %43, %17 : vector<8x1xf32>
    %45 = vector.shape_cast %44 : vector<8x1xf32> to vector<1x8x1xf32>
    %cst_14 = arith.constant dense<0.000000e+00> : vector<1xf32>
    %46 = vector.multi_reduction <add>, %45, %cst_14 [1, 2] : vector<1x8x1xf32> to vector<1xf32>
    %47 = vector.shape_cast %46 : vector<1xf32> to vector<1x1x1xf32>
    %48 = vector.extract %47[0, 0, 0] : f32 from vector<1x1x1xf32>
    %cst_15 = arith.constant 3.000000e+00 : f32
    %49 = arith.mulf %cst_15, %48 : f32
    %50 = arith.addf %30, %49 : f32
    %c0_16 = arith.constant 0 : index
    %c0_17 = arith.constant 0 : index
    %51 = memref.load %arg4[%c0_16, %c0_17] : memref<1x1xf32, #tpu.memory_space<smem>>
    memref.store %50, %arg4[%c0_16, %c0_17] : memref<1x1xf32, #tpu.memory_space<smem>>
    return
  }
  func.func @transform_0(%arg0: i32) -> (i32, i32) {
    %c0_i32 = arith.constant 0 : i32
    %c0_i32_0 = arith.constant 0 : i32
    return %arg0, %c0_i32 : i32, i32
  }
  func.func @transform_1(%arg0: i32) -> (i32, i32) {
    %c0_i32 = arith.constant 0 : i32
    %c0_i32_0 = arith.constant 0 : i32
    return %arg0, %c0_i32 : i32, i32
  }
  func.func @transform_2(%arg0: i32) -> (i32, i32) {
    %c0_i32 = arith.constant 0 : i32
    %c0_i32_0 = arith.constant 0 : i32
    return %arg0, %c0_i32 : i32, i32
  }
  func.func @transform_3(%arg0: i32) -> (i32, i32) {
    %c0_i32 = arith.constant 0 : i32
    %c0_i32_0 = arith.constant 0 : i32
    return %arg0, %c0_i32 : i32, i32
  }
}

</mosaic_0001>

<llo_original>
// kernel: tpu_custom_call.1
$region0: #{tpu_custom_call.1}
  #allocation0 [shape = 'u32[]', space=smem, size = 0x4, offset = 0x4, fixed_abs, tag = 'smem constant byte address 0x4 - core index']
  #allocation1 [shape = 'u32[72,128]{1,0:T(1,128)}', space=vmem, size = 0x9000, scoped, tag = 'internal scratch']
  %s0 = inlined_call_operand.hbm [shape: f32[8,128], index: 0, kind: input, shape index: {}]
  %s1 = inlined_call_operand.hbm [shape: f32[8,128], index: 1, kind: input, shape index: {}]
  %s2 = inlined_call_operand.hbm [shape: f32[8,128], index: 2, kind: input, shape index: {}]
  %s3 = inlined_call_operand.hbm [shape: f32[1,1], index: 3, kind: output, shape index: {}]
  %s4 = sld [smem:[#allocation0]]
  $region34: #{tpu_custom_call.1} parent=0
    _
  %s6 = ssub.s32 1, %s4
  %s7 = scalar_select 0, %s6, %s4
  $region1: #{tpu_custom_call.1} parent=0
    #allocation2 [shape = 'u8[4096]{0}', space=vmem, size = 0x1000, scoped, tag = 'input window, operand 0, single buffered']
    #allocation3 [shape = 's32[1]{0}', space=sflag, size = 0x4, scoped, tag = 'scoped memory for tpu_custom_call.1']
    #allocation4 [shape = 's32[1]{0}', space=sflag, size = 0x4, scoped, tag = 'scoped memory for tpu_custom_call.1']
    #allocation5 [shape = 'u8[4096]{0}', space=vmem, size = 0x1000, scoped, tag = 'input window, operand 1, single buffered']
    #allocation6 [shape = 's32[1]{0}', space=sflag, size = 0x4, scoped, tag = 'scoped memory for tpu_custom_call.1']
    #allocation7 [shape = 'u8[4096]{0}', space=vmem, size = 0x1000, scoped, tag = 'input window, operand 2, single buffered']
    #allocation8 [shape = 'u8[512]{0}', space=smem, size = 0x200, scoped, tag = 'output window, operand 0, single buffered']
    %8 = vsyncpa [#allocation3], 0
    %9 = vsyncpa [#allocation6], 0
    %10 = vsyncpa [#allocation4], 0
    // Predicated region
    $region2: #{tpu_custom_call.1} parent=1 // pred_check
      _
    $region3: #{tpu_custom_call.1} parent=1 // pred_check_branch
      %12 = sbr.rel (0) target = $region5
    $region4: #{tpu_custom_call.1} parent=1 // pred_region
      %14 = vsyncadd [#allocation3], 0
      %s16 = sshll.u32 %s0, 4
      %s17 = int_to_ptr.hbm [resolvable:$true] %s16
      %s18 = sshll.u32 [#allocation2], 4
      %s19 = int_to_ptr.vmem [resolvable:$true] %s18
      %21 = dma.hbm_to_vmem [thread:$0]  %s17, 128, %s19, [#allocation3]
    $region5: #{tpu_custom_call.1} parent=1 // pred_fallthru
      _
    // Predicated region
    $region6: #{tpu_custom_call.1} parent=1 // pred_check
      _
    $region7: #{tpu_custom_call.1} parent=1 // pred_check_branch
      %23 = sbr.rel (0) target = $region9
    $region8: #{tpu_custom_call.1} parent=1 // pred_region
      %25 = vsyncadd [#allocation6], 0
      %s27 = sshll.u32 %s1, 4
      %s28 = int_to_ptr.hbm [resolvable:$true] %s27
      %s29 = sshll.u32 [#allocation5], 4
      %s30 = int_to_ptr.vmem [resolvable:$true] %s29
      %32 = dma.hbm_to_vmem [thread:$0]  %s28, 128, %s30, [#allocation6]
    $region9: #{tpu_custom_call.1} parent=1 // pred_fallthru
      _
    // Predicated region
    $region10: #{tpu_custom_call.1} parent=1 // pred_check
      _
    $region11: #{tpu_custom_call.1} parent=1 // pred_check_branch
      %34 = sbr.rel (0) target = $region13
    $region12: #{tpu_custom_call.1} parent=1 // pred_region
      %36 = vsyncadd [#allocation6], 0
      %s38 = sshll.u32 %s2, 4
      %s39 = int_to_ptr.hbm [resolvable:$true] %s38
      %s40 = sshll.u32 [#allocation7], 4
      %s41 = int_to_ptr.vmem [resolvable:$true] %s40
      %43 = dma.hbm_to_vmem [thread:$0]  %s39, 128, %s41, [#allocation6]
    $region13: #{tpu_custom_call.1} parent=1 // pred_fallthru
      _
    // Predicated region
    $region14: #{tpu_custom_call.1} parent=1 // pred_check
      _
    $region15: #{tpu_custom_call.1} parent=1 // pred_check_branch
      %45 = sbr.rel (0) target = $region17
    $region16: #{tpu_custom_call.1} parent=1 // pred_region
      %47 = dma.done [#allocation3], 128
    $region17: #{tpu_custom_call.1} parent=1 // pred_fallthru
      _
    // Predicated region
    $region18: #{tpu_custom_call.1} parent=1 // pred_check
      _
    $region19: #{tpu_custom_call.1} parent=1 // pred_check_branch
      %49 = sbr.rel (0) target = $region21
    $region20: #{tpu_custom_call.1} parent=1 // pred_region
      %51 = dma.done [#allocation6], 128
    $region21: #{tpu_custom_call.1} parent=1 // pred_fallthru
      _
    // Predicated region
    $region22: #{tpu_custom_call.1} parent=1 // pred_check
      _
    $region23: #{tpu_custom_call.1} parent=1 // pred_check_branch
      %53 = sbr.rel (0) target = $region25
    $region24: #{tpu_custom_call.1} parent=1 // pred_region
      %55 = dma.done [#allocation6], 128
    $region25: #{tpu_custom_call.1} parent=1 // pred_fallthru
      _
    %s56 = smul.u32 0, 8
    %v57 = vld [vmem:[#allocation2] sm:$0xff]
    %v58 = vld [vmem:[#allocation5] sm:$0xff]
    %v59 = vld [vmem:[#allocation7] sm:$0xff]
    %60 = vmax.xlane.f32.xlu0 %v57
    %v61 = vpop.xlane.xlu0 %60
    %v62 = vsub.f32 %v57, %v61
    %v63 = vmul.f32 %v62, 1.442695
    %v64 = vpow.pop %v63
    %65 = vadd.xlane.f32.xlu0 %v64
    %v66 = vpop.xlane.xlu0 %65
    %v67 = vlaneseq
    %v68 = vshrl.u32 %v67, 7
    %v69 = vstv %s56
    %v70 = vadd.s32 %v69, %v68
    %vm71 = vcmp.lt.s32.totalorder %v70, 8
    %v72 = vsel %vm71, 1, 0
    %v73 = vcvt.s32.f32 %v72
    %v74 = vlog2.pop %v66
    %v75 = vmul.f32 %v74, 0.6931472
    %76 = vadd.xlane.f32.xlu0 %v58
    %v77 = vpop.xlane.xlu0 %76
    %v78 = vmul.f32 %v58, %v62
    %79 = vadd.xlane.f32.xlu0 %v78
    %v80 = vpop.xlane.xlu0 %79
    %v81 = vmul.f32 %v75, %v77
    %v82 = vsub.f32 %v81, %v80
    %v83 = vmul.f32 %v82, %v73
    %vm84 = vcmask 7168
    %v85 = vsel %vm84, %v83, 0.0
    %86 = vadd.xlane.f32.xlu0 %v85
    %v87 = vpop.xlane.xlu0 %86
    %v88 = vrot.slane %v87, 4
    %v89 = vadd.f32 %v87, %v88
    %v90 = vrot.slane %v89, 2
    %v91 = vadd.f32 %v89, %v90
    %v92 = vrot.slane %v91, 1
    %v93 = vadd.f32 %v91, %v92
    %s94 = vtos %v93
    %v95 = vrcp.pop %v66
    %v96 = vmul.f32 %v66, %v95
    %v97 = vsub.f32 1.0, %v96
    %v98 = vmul.f32 %v95, %v97
    %v99 = vadd.f32 %v95, %v98
    %vm100 = vweird.f32 %v66
    %vm101 = vweird.f32 %v95
    %vm102 = vmor %vm100, %vm101
    %v103 = vsel %vm102, %v95, %v99
    %v104 = vand.u32 2147483647, %v66
    %vm105 = vcmp.eq.f32.partialorder %v104, 8.507059e+37
    %v106 = vand.u32 %v66, 2147483648
    %v107 = vor.u32 1.1754944e-38, %v106
    %v108 = vsel %vm105, %v107, %v103
    %v109 = vmul.f32 %v64, %v108
    %v110 = vmax.f32 %v109, 0.0001
    %v111 = vmin.f32 %v110, 0.9999
    %v112 = vmul.f32 %v59, %v111
    %113 = vadd.xlane.f32.xlu0 %v112
    %v114 = vpop.xlane.xlu0 %113
    %v115 = vmul.f32 %v114, %v73
    %v116 = vsub.f32 1.0, %v115
    %v117 = vlog2.pop %v116
    %v118 = vmul.f32 %v117, 0.6931472
    %v119 = vmul.f32 %v118, %v73
    %v120 = vsel %vm84, %v119, 0.0
    %121 = vadd.xlane.f32.xlu0 %v120
    %v122 = vpop.xlane.xlu0 %121
    %v123 = vrot.slane %v122, 4
    %v124 = vadd.f32 %v122, %v123
    %v125 = vrot.slane %v124, 2
    %v126 = vadd.f32 %v124, %v125
    %v127 = vrot.slane %v126, 1
    %v128 = vadd.f32 %v126, %v127
    %s129 = vtos %v128
    %s130 = smul.f32 %s129, 3.0
    %s131 = sadd.f32 %s94, %s130
    %s132 = scalar_lea.smem [#allocation8], 0
    %133 = sst [smem:[%s132]] %s131
    // Predicated region
    $region26: #{tpu_custom_call.1} parent=1 // pred_check
      _
    $region27: #{tpu_custom_call.1} parent=1 // pred_check_branch
      %135 = sbr.rel (0) target = $region29
    $region28: #{tpu_custom_call.1} parent=1 // pred_region
      %137 = vsyncadd [#allocation4], 0
      %s139 = sshll.u32 %s3, 4
      %s140 = int_to_ptr.hbm [resolvable:$true] %s139
      %142 = dma.smem_to_hbm [#allocation8], 16, %s140, [#allocation4]
    $region29: #{tpu_custom_call.1} parent=1 // pred_fallthru
      _
    // Predicated region
    $region30: #{tpu_custom_call.1} parent=1 // pred_check
      _
    $region31: #{tpu_custom_call.1} parent=1 // pred_check_branch
      %144 = sbr.rel (0) target = $region33
    $region32: #{tpu_custom_call.1} parent=1 // pred_region
      %146 = dma.done [#allocation4], 16
    $region33: #{tpu_custom_call.1} parent=1 // pred_fallthru
      _
    %147 = sfence
    %148 = vsyncpa [#allocation3], 1
    %149 = vsyncpa [#allocation6], 1
    %150 = vsyncpa [#allocation4], 1

</llo_original>
